<compile_context>
chip_gen: v6e
topology: v6e:2x2x1
jax: 0.10.0
libtpu: 0.0.40
codegen_flags: <defaults>
</compile_context>

<pallas_src>
import jax
import jax.numpy as jnp
from jax.experimental import pallas as pl
from jax.experimental.pallas import tpu as pltpu

A_COEF = 0.8519
B_COEF = 0.8478

_TARGET_BLOCK_BYTES = 8 * 1024 * 1024    # per-block bytes for the tiled path
_SINGLE_BLOCK_BYTES = 4 * 1024 * 1024    # below this: one whole-array block
_MIN_GRID_STEPS = 4                      # keep >=4 steps so both v7x TCs are busy
_VMEM_LIMIT_BYTES = 48 * 1024 * 1024     # 32 MiB scratch + headroom; v7x-safe
_LANE_CANDIDATES = (4096, 2048, 1024, 512, 256, 128)
_PAD_LANE = 1024                         # 8 x 128; pad target for odd sizes


def _tp14_kernel(p_ref, o_ref):
    p = p_ref[...]
    # p * 0.8519 * p + 0.8478, computed in the input dtype (matches PyTorch).
    o_ref[...] = p * jnp.asarray(A_COEF, p.dtype) * p + jnp.asarray(B_COEF, p.dtype)


def tp14_forward(p):
    orig_shape = p.shape
    # PyTorch promotes int tensors * float scalar to float; mirror that.
    if not jnp.issubdtype(p.dtype, jnp.floating):
        p = p.astype(jnp.float32)
    dtype = p.dtype
    itemsize = jnp.dtype(dtype).itemsize
    # dtype-aware minimum sublane tile: f32 -> 8, bf16/f16 -> 16, int8/fp8 -> 32
    sub_min = {4: 8, 2: 16, 1: 32}.get(itemsize, 8)

    flat = p.reshape(-1)
    n = flat.shape[0]

    # Widest lane width (multiple of 128) that divides n -> no padding copy.
    lane = None
    for cand in _LANE_CANDIDATES:
        if n % cand == 0:
            lane = cand
            break

    padded = False
    if lane is None:
        # Odd element count: pad to a lane-dense multiple (pad values are
        # irrelevant for a pure elementwise map), run the normal path, then
        # slice the result back to the original size.
        lane = _PAD_LANE
        pad = (-n) % lane
        flat = jnp.pad(flat, (0, pad))
        padded = True

    n_work = flat.shape[0]
    rows = n_work // lane
    total_bytes = n_work * itemsize
    x2d = flat.reshape(rows, lane)

    if total_bytes <= _SINGLE_BLOCK_BYTES:
        # Small/medium input: one grid step, whole array as one block.
        out2d = pl.pallas_call(
            _tp14_kernel,
            out_shape=jax.ShapeDtypeStruct((rows, lane), dtype),
            input_output_aliases={0: 0},
        )(x2d)
    else:
        # Tiled streaming path: ~8 MiB blocks, capped so the grid has >= 4
        # steps; sublane-aligned row tiles; ragged tail handled by pl.cdiv
        # grid + masked stores.
        block_bytes = min(_TARGET_BLOCK_BYTES, total_bytes // _MIN_GRID_STEPS)
        tile_rows = (block_bytes // (lane * itemsize)) // sub_min * sub_min
        tile_rows = max(sub_min, min(tile_rows, rows))
        grid = (pl.cdiv(rows, tile_rows),)

        out2d = pl.pallas_call(
            _tp14_kernel,
            out_shape=jax.ShapeDtypeStruct((rows, lane), dtype),
            grid_spec=pltpu.PrefetchScalarGridSpec(
                num_scalar_prefetch=0,
                grid=grid,
                in_specs=[pl.BlockSpec((tile_rows, lane), lambda i: (i, 0))],
                out_specs=pl.BlockSpec((tile_rows, lane), lambda i: (i, 0)),
            ),
            compiler_params=pltpu.CompilerParams(
                dimension_semantics=("parallel",),
                vmem_limit_bytes=_VMEM_LIMIT_BYTES,
            ),
            cost_estimate=pl.CostEstimate(
                flops=3 * n_work,
                transcendentals=0,
                bytes_accessed=2 * n_work * itemsize,
            ),
            input_output_aliases={0: 0},
        )(x2d)

    out_flat = out2d.reshape(-1)
    if padded:
        out_flat = out_flat[:n]
    return out_flat.reshape(orig_shape)


if __name__ == "__main__":
    key = jax.random.PRNGKey(0)

    # Small NCHW input consistent with the module (m, l unused in forward).
    x = jax.random.normal(key, (2, 4, 16, 16), dtype=jnp.float32)
    out = jax.block_until_ready(tp14_forward(x))
    ref = x * A_COEF * x + B_COEF
    assert jnp.allclose(out, ref, atol=1e-6, rtol=1e-6), "mismatch (small path)"

    # Exercise the tiled (grid > 1, parallel) path once: 8 MiB of f32.
    x_big = jax.random.normal(jax.random.PRNGKey(1), (8, 16, 128, 128), dtype=jnp.float32)
    out_big = jax.block_until_ready(tp14_forward(x_big))
    ref_big = x_big * A_COEF * x_big + B_COEF
    assert jnp.allclose(out_big, ref_big, atol=1e-6, rtol=1e-6), "mismatch (tiled path)"

    # Exercise the padded (odd element count) path once.
    x_odd = jax.random.normal(jax.random.PRNGKey(2), (3, 5, 7, 11), dtype=jnp.float32)
    out_odd = jax.block_until_ready(tp14_forward(x_odd))
    ref_odd = x_odd * A_COEF * x_odd + B_COEF
    assert jnp.allclose(out_odd, ref_odd, atol=1e-6, rtol=1e-6), "mismatch (padded path)"

    print("KERNEL_OK")
</pallas_src>

<mosaic_0001>
module attributes {stable_mosaic.version = 11 : i64} {
  func.func @_tp14_kernel(%arg0: memref<1x2048xf32, #tpu.memory_space<vmem>>, %arg1: memref<1x2048xf32, #tpu.memory_space<vmem>>) attributes {dimension_semantics = [], scalar_prefetch = 0 : i64, scratch_operands = 0 : i64, tpu.core_type = #tpu.core_type<tc>} {
    %c0 = arith.constant 0 : index
    %c0_0 = arith.constant 0 : index
    %0 = vector.load %arg0[%c0, %c0_0] : memref<1x2048xf32, #tpu.memory_space<vmem>>, vector<1x2048xf32>
    %cst = arith.constant 0.851899981 : f32
    %1 = vector.broadcast %cst : f32 to vector<1x2048xf32>
    %2 = arith.mulf %0, %1 : vector<1x2048xf32>
    %3 = arith.mulf %2, %0 : vector<1x2048xf32>
    %cst_1 = arith.constant 8.478000e-01 : f32
    %4 = vector.broadcast %cst_1 : f32 to vector<1x2048xf32>
    %5 = arith.addf %3, %4 : vector<1x2048xf32>
    %c0_2 = arith.constant 0 : index
    %c0_3 = arith.constant 0 : index
    %6 = vector.load %arg1[%c0_2, %c0_3] : memref<1x2048xf32, #tpu.memory_space<vmem>>, vector<1x2048xf32>
    tpu.vector_store %arg1[%c0_2, %c0_3], %5 {strides = array<i32>} : memref<1x2048xf32, #tpu.memory_space<vmem>>, vector<1x2048xf32>,
    return
  }
}

</mosaic_0001>

<llo_original>
// kernel: tpu_custom_call.1
$region0: #{tpu_custom_call.1}
  #allocation0 [shape = 'u32[]', space=smem, size = 0x4, offset = 0x4, fixed_abs, tag = 'smem constant byte address 0x4 - core index']
  #allocation1 [shape = 'u32[144,128]{1,0:T(1,128)}', space=vmem, size = 0x12000, scoped, tag = 'internal scratch']
  %s0 = inlined_call_operand.hbm [shape: f32[1,2048], index: 0, kind: input, shape index: {}, may-alias: {0,1}]
  %s1 = inlined_call_operand.hbm [shape: f32[1,2048], index: 1, kind: output, shape index: {}, may-alias: {0,1}]
  %s2 = sld [smem:[#allocation0]]
  $region18: #{tpu_custom_call.1} parent=0
    _
  %s4 = ssub.s32 1, %s2
  %s5 = scalar_select 0, %s4, %s2
  $region1: #{tpu_custom_call.1} parent=0
    #allocation2 [shape = 'u8[8192]{0}', space=vmem, size = 0x2000, scoped, tag = 'input window, operand 0, single buffered']
    #allocation3 [shape = 's32[1]{0}', space=sflag, size = 0x4, scoped, tag = 'scoped memory for tpu_custom_call.1']
    #allocation4 [shape = 's32[1]{0}', space=sflag, size = 0x4, scoped, tag = 'scoped memory for tpu_custom_call.1']
    #allocation5 [shape = 'u8[8192]{0}', space=vmem, size = 0x2000, scoped, tag = 'output window, operand 0, single buffered']
    %6 = vsyncpa [#allocation3], 0
    %7 = vsyncpa [#allocation4], 0
    // Predicated region
    $region2: #{tpu_custom_call.1} parent=1 // pred_check
      _
    $region3: #{tpu_custom_call.1} parent=1 // pred_check_branch
      %9 = sbr.rel (0) target = $region5
    $region4: #{tpu_custom_call.1} parent=1 // pred_region
      %s11 = ssub.s32 256, 256
      %12 = vsyncadd [#allocation3], %s11
      %s14 = sshll.u32 [#allocation2], 4
      %s15 = int_to_ptr.vmem [resolvable:$true] %s14
      %17 = dma.hbm_to_vmem [thread:$0]  %s0, 256, %s15, [#allocation3]
    $region5: #{tpu_custom_call.1} parent=1 // pred_fallthru
      _
    // Predicated region
    $region6: #{tpu_custom_call.1} parent=1 // pred_check
      _
    $region7: #{tpu_custom_call.1} parent=1 // pred_check_branch
      %19 = sbr.rel (0) target = $region9
    $region8: #{tpu_custom_call.1} parent=1 // pred_region
      %20 = dma.done [#allocation3], 256
    $region9: #{tpu_custom_call.1} parent=1 // pred_fallthru
      _
    %v21 = vld [vmem:[#allocation2] sm:$0xff]
    %v22 = vld [vmem:[#allocation2 + $0x8] sm:$0xff]
    %v23 = vmul.f32 %v21, 0.8519
    %v24 = vmul.f32 %v22, 0.8519
    %v25 = vmul.f32 %v23, %v21
    %v26 = vmul.f32 %v24, %v22
    %v27 = vadd.f32 %v25, 0.8478
    %v28 = vadd.f32 %v26, 0.8478
    %29 = vst [vmem:[#allocation5] sm:$0xff] %v27
    %30 = vst [vmem:[#allocation5 + $0x8] sm:$0xff] %v28
    // Predicated region
    $region10: #{tpu_custom_call.1} parent=1 // pred_check
      _
    $region11: #{tpu_custom_call.1} parent=1 // pred_check_branch
      %32 = sbr.rel (0) target = $region13
    $region12: #{tpu_custom_call.1} parent=1 // pred_region
      %s34 = ssub.s32 256, 256
      %35 = vsyncadd [#allocation4], %s34
      %s37 = sshll.u32 [#allocation5], 4
      %s38 = int_to_ptr.vmem [resolvable:$true] %s37
      %40 = dma.vmem_to_hbm [thread:$0]  %s38, 256, %s1, [#allocation4]
    $region13: #{tpu_custom_call.1} parent=1 // pred_fallthru
      _
    // Predicated region
    $region14: #{tpu_custom_call.1} parent=1 // pred_check
      _
    $region15: #{tpu_custom_call.1} parent=1 // pred_check_branch
      %42 = sbr.rel (0) target = $region17
    $region16: #{tpu_custom_call.1} parent=1 // pred_region
      %43 = dma.done [#allocation4], 256
    $region17: #{tpu_custom_call.1} parent=1 // pred_fallthru
      _
    %44 = vsyncpa [#allocation3], 1
    %45 = vsyncpa [#allocation4], 1

</llo_original>
